<compile_context>
chip_gen: v6e
topology: v6e:2x2x1
jax: 0.10.0
libtpu: 0.0.40
codegen_flags: <defaults>
</compile_context>

<pallas_src>
import functools
import math

import jax
import jax.numpy as jnp
from jax.experimental import pallas as pl
from jax.experimental.pallas import tpu as pltpu


# ----------------------------------------------------------------------------
# Fused kernel: banded-conv matmul + bias + ReLU + per-conv max-pool + linear.
# All operands are full arrays resident in VMEM (no grid).
# ----------------------------------------------------------------------------
def _textcnn_kernel(x_ref, wb_ref, bb_ref, w1_ref, b1_ref, o_ref, *, L3, L4, L5):
    x = x_ref[...]                                            # (B, S*E)
    # One MXU call computes every conv3/conv4/conv5 output position at once.
    y = jnp.dot(x, wb_ref[...],
                preferred_element_type=jnp.float32) + bb_ref[...]   # (B, L3+L4+L5)
    y = jnp.maximum(y, 0.0)                                   # ReLU
    # MaxPool over the full valid length of each conv (columns are grouped).
    f3 = jnp.max(y[:, :L3], axis=-1, keepdims=True)           # (B, 1)
    f4 = jnp.max(y[:, L3:L3 + L4], axis=-1, keepdims=True)    # (B, 1)
    f5 = jnp.max(y[:, L3 + L4:L3 + L4 + L5], axis=-1, keepdims=True)
    # Linear(3, label_num): features ordered [conv3, conv4, conv5] as in
    # torch.cat((x1, x2, x3), -1).  w1 is stored transposed (3, NPAD).
    w1 = w1_ref[...]
    out = f3 * w1[0:1, :] + f4 * w1[1:2, :] + f5 * w1[2:3, :] + b1_ref[...]
    o_ref[...] = out                                          # (B, NPAD) lane-dense


def textcnn_forward(params, x):
    # x: (sentence_max_size, batch, 100); batch = x.shape[1]; permute(1, 0, 2)
    # exactly as in the PyTorch forward, then flatten (S, E) for the banded conv.
    S, B, E = x.shape
    xb = jnp.transpose(x, (1, 0, 2)).reshape(B, S * E)
    L3, L4, L5 = params['lens']
    kernel = functools.partial(_textcnn_kernel, L3=L3, L4=L4, L5=L5)
    vmem = pltpu.MemorySpace.VMEM
    out = pl.pallas_call(
        kernel,
        out_shape=jax.ShapeDtypeStruct((B, params['npad']), jnp.float32),
        in_specs=[pl.BlockSpec(memory_space=vmem)] * 5,
        out_specs=pl.BlockSpec(memory_space=vmem),
    )(xb, params['w_band'], params['b_band'], params['w1'], params['b1'])
    return out[:, :params['label_num']]                        # (batch, label_num)


# ----------------------------------------------------------------------------
# Parameters: synthetic, deterministic.  Conv weights are additionally stored
# as one block-Toeplitz "band" matrix so the whole conv stack is a single
# matmul inside the kernel (pure weight re-layout, done once at init).
# ----------------------------------------------------------------------------
def init_params(key, S, E, label_num, npad=128):
    keys = iter(jax.random.split(key, 16))

    def u(shape, scale):
        return jax.random.uniform(next(keys), shape, jnp.float32, -scale, scale)

    conv_raw = {}
    for k in (3, 4, 5):
        s = 1.0 / math.sqrt(k * E)
        conv_raw[k] = (u((k, E), s), u((), s))       # (weight (k,E), bias scalar)

    s1 = 1.0 / math.sqrt(3)
    w1 = u((3, label_num), s1)                        # transposed torch linear1.weight
    b1 = u((1, label_num), s1)
    w1p = jnp.zeros((3, npad), jnp.float32).at[:, :label_num].set(w1)
    b1p = jnp.zeros((1, npad), jnp.float32).at[:, :label_num].set(b1)

    def conv_band(w, b):
        k, e = w.shape
        L = S - k + 1
        wf = w.reshape(-1)
        cols = [
            jnp.concatenate([jnp.zeros((t * e,), jnp.float32), wf,
                             jnp.zeros(((S - k - t) * e,), jnp.float32)])
            for t in range(L)
        ]
        return jnp.stack(cols, axis=1), jnp.full((1, L), b, jnp.float32)

    bands, biases, lens = [], [], []
    for k in (3, 4, 5):
        w, b = conv_raw[k]
        band, bias = conv_band(w, b)
        bands.append(band)
        biases.append(bias)
        lens.append(S - k + 1)

    return {
        'w_band': jnp.concatenate(bands, axis=1),     # (S*E, L3+L4+L5)
        'b_band': jnp.concatenate(biases, axis=1),    # (1, L3+L4+L5)
        'w1': w1p, 'b1': b1p,                         # lane-padded classifier
        'conv_raw': conv_raw,
        'lens': tuple(lens), 'label_num': label_num, 'npad': npad,
    }


# Pure-JAX reference (direct windowed conv) for a correctness spot-check.
def ref_forward(params, x):
    S, B, E = x.shape
    xb = jnp.transpose(x, (1, 0, 2))                  # (B, S, E)
    feats = []
    for k in (3, 4, 5):
        w, b = params['conv_raw'][k]
        L = S - k + 1
        y = jnp.stack(
            [jnp.einsum('bse,se->b', xb[:, t:t + k, :], w) for t in range(L)],
            axis=1) + b                               # (B, L)
        feats.append(jnp.max(jax.nn.relu(y), axis=1))
    feat = jnp.stack(feats, axis=1)                   # (B, 3)
    w1 = params['w1'][:, :params['label_num']]
    b1 = params['b1'][:, :params['label_num']]
    return feat @ w1 + b1


if __name__ == "__main__":
    key = jax.random.PRNGKey(0)
    k_par, k_x = jax.random.split(key)

    S, B, E, label_num = 16, 2, 100, 7                # sentence_max_size=16, 100-d embeddings
    params = init_params(k_par, S, E, label_num)

    x = jax.random.normal(k_x, (S, B, E), jnp.float32)

    out = textcnn_forward(params, x)
    jax.block_until_ready(out)

    assert out.shape == (B, label_num)
    assert bool(jnp.all(jnp.isfinite(out)))

    ref = ref_forward(params, x)
    assert bool(jnp.allclose(out, ref, atol=2e-2, rtol=2e-2))

    print("KERNEL_OK")
</pallas_src>

<mosaic_0001>
module attributes {stable_mosaic.version = 11 : i64} {
  func.func @_textcnn_kernel(%arg0: memref<2x1600xf32, #tpu.memory_space<vmem>>, %arg1: memref<1600x39xf32, #tpu.memory_space<vmem>>, %arg2: memref<1x39xf32, #tpu.memory_space<vmem>>, %arg3: memref<3x128xf32, #tpu.memory_space<vmem>>, %arg4: memref<1x128xf32, #tpu.memory_space<vmem>>, %arg5: memref<2x128xf32, #tpu.memory_space<vmem>>) attributes {dimension_semantics = [], scalar_prefetch = 0 : i64, scratch_operands = 0 : i64, tpu.core_type = #tpu.core_type<tc>} {
    %c0 = arith.constant 0 : index
    %c0_0 = arith.constant 0 : index
    %0 = vector.load %arg0[%c0, %c0_0] : memref<2x1600xf32, #tpu.memory_space<vmem>>, vector<2x1600xf32>
    %c0_1 = arith.constant 0 : index
    %c0_2 = arith.constant 0 : index
    %1 = vector.load %arg1[%c0_1, %c0_2] : memref<1600x39xf32, #tpu.memory_space<vmem>>, vector<1600x39xf32>
    %cst = arith.constant dense<0.000000e+00> : vector<2x39xf32>
    %2 = tpu.matmul %0, %1, %cst {dimension_numbers = #tpu.dot_dimension_numbers<[1], [0], [0], [1], [0, 0, 1, 1], [], []>} : vector<2x1600xf32>, vector<1600x39xf32>, vector<2x39xf32> -> vector<2x39xf32>
    %c0_3 = arith.constant 0 : index
    %c0_4 = arith.constant 0 : index
    %3 = vector.load %arg2[%c0_3, %c0_4] : memref<1x39xf32, #tpu.memory_space<vmem>>, vector<1x39xf32>
    %4 = vector.broadcast %3 : vector<1x39xf32> to vector<2x39xf32>
    %5 = arith.addf %2, %4 : vector<2x39xf32>
    %cst_5 = arith.constant 0.000000e+00 : f32
    %6 = vector.broadcast %cst_5 : f32 to vector<2x39xf32>
    %7 = arith.maximumf %5, %6 : vector<2x39xf32>
    %8 = vector.extract_strided_slice %7 {offsets = [0, 0], sizes = [2, 14], strides = [1, 1]} : vector<2x39xf32> to vector<2x14xf32>
    %cst_6 = arith.constant dense<0xFF800000> : vector<2xf32>
    %9 = vector.multi_reduction <maximumf>, %8, %cst_6 [1] : vector<2x14xf32> to vector<2xf32>
    %10 = vector.shape_cast %9 : vector<2xf32> to vector<2x1xf32>
    %11 = vector.extract_strided_slice %7 {offsets = [0, 14], sizes = [2, 13], strides = [1, 1]} : vector<2x39xf32> to vector<2x13xf32>
    %cst_7 = arith.constant dense<0xFF800000> : vector<2xf32>
    %12 = vector.multi_reduction <maximumf>, %11, %cst_7 [1] : vector<2x13xf32> to vector<2xf32>
    %13 = vector.shape_cast %12 : vector<2xf32> to vector<2x1xf32>
    %14 = vector.extract_strided_slice %7 {offsets = [0, 27], sizes = [2, 12], strides = [1, 1]} : vector<2x39xf32> to vector<2x12xf32>
    %cst_8 = arith.constant dense<0xFF800000> : vector<2xf32>
    %15 = vector.multi_reduction <maximumf>, %14, %cst_8 [1] : vector<2x12xf32> to vector<2xf32>
    %16 = vector.shape_cast %15 : vector<2xf32> to vector<2x1xf32>
    %c0_9 = arith.constant 0 : index
    %c0_10 = arith.constant 0 : index
    %17 = vector.load %arg3[%c0_9, %c0_10] : memref<3x128xf32, #tpu.memory_space<vmem>>, vector<3x128xf32>
    %18 = vector.extract_strided_slice %17 {offsets = [0, 0], sizes = [1, 128], strides = [1, 1]} : vector<3x128xf32> to vector<1x128xf32>
    %19 = vector.broadcast %10 : vector<2x1xf32> to vector<2x128xf32>
    %20 = vector.broadcast %18 : vector<1x128xf32> to vector<2x128xf32>
    %21 = arith.mulf %19, %20 : vector<2x128xf32>
    %22 = vector.extract_strided_slice %17 {offsets = [1, 0], sizes = [1, 128], strides = [1, 1]} : vector<3x128xf32> to vector<1x128xf32>
    %23 = vector.broadcast %13 : vector<2x1xf32> to vector<2x128xf32>
    %24 = vector.broadcast %22 : vector<1x128xf32> to vector<2x128xf32>
    %25 = arith.mulf %23, %24 : vector<2x128xf32>
    %26 = arith.addf %21, %25 : vector<2x128xf32>
    %27 = vector.extract_strided_slice %17 {offsets = [2, 0], sizes = [1, 128], strides = [1, 1]} : vector<3x128xf32> to vector<1x128xf32>
    %28 = vector.broadcast %16 : vector<2x1xf32> to vector<2x128xf32>
    %29 = vector.broadcast %27 : vector<1x128xf32> to vector<2x128xf32>
    %30 = arith.mulf %28, %29 : vector<2x128xf32>
    %31 = arith.addf %26, %30 : vector<2x128xf32>
    %c0_11 = arith.constant 0 : index
    %c0_12 = arith.constant 0 : index
    %32 = vector.load %arg4[%c0_11, %c0_12] : memref<1x128xf32, #tpu.memory_space<vmem>>, vector<1x128xf32>
    %33 = vector.broadcast %32 : vector<1x128xf32> to vector<2x128xf32>
    %34 = arith.addf %31, %33 : vector<2x128xf32>
    %c0_13 = arith.constant 0 : index
    %c0_14 = arith.constant 0 : index
    %35 = vector.load %arg5[%c0_13, %c0_14] : memref<2x128xf32, #tpu.memory_space<vmem>>, vector<2x128xf32>
    tpu.vector_store %arg5[%c0_13, %c0_14], %34 {strides = array<i32>} : memref<2x128xf32, #tpu.memory_space<vmem>>, vector<2x128xf32>,
    return
  }
}

</mosaic_0001>

<llo_original>
// kernel: tpu_custom_call.1
$region0: #{tpu_custom_call.1}
  #allocation0 [shape = 'u32[]', space=smem, size = 0x4, offset = 0x4, fixed_abs, tag = 'smem constant byte address 0x4 - core index']
  #allocation1 [shape = 'u32[144,128]{1,0:T(1,128)}', space=vmem, size = 0x12000, scoped, tag = 'internal scratch']
  %s0 = inlined_call_operand.vmem [shape: f32[2,1600], index: 0, kind: input, shape index: {}]
  %s1 = inlined_call_operand.vmem [shape: f32[1600,39], index: 1, kind: input, shape index: {}]
  %s2 = inlined_call_operand.vmem [shape: f32[1,39], index: 2, kind: input, shape index: {}]
  %s3 = inlined_call_operand.vmem [shape: f32[3,128], index: 3, kind: input, shape index: {}]
  %s4 = inlined_call_operand.vmem [shape: f32[1,128], index: 4, kind: input, shape index: {}]
  %s5 = inlined_call_operand.hbm [shape: f32[2,128], index: 5, kind: output, shape index: {}]
  %s6 = sld [smem:[#allocation0]]
  $region30: #{tpu_custom_call.1} parent=0
    _
  %s8 = ssub.s32 1, %s6
  %s9 = scalar_select 0, %s8, %s6
  $region1: #{tpu_custom_call.1} parent=0
    #allocation2 [shape = 'u8[1024]{0}', space=vmem, size = 0x400, scoped, tag = 'output window, operand 0, single buffered']
    #allocation3 [shape = 's32[1]{0}', space=sflag, size = 0x4, scoped, tag = 'scoped memory for tpu_custom_call.1']
    %10 = vsyncpa [#allocation3], 0
    // Predicated region
    $region2: #{tpu_custom_call.1} parent=1 // pred_check
      _
    $region3: #{tpu_custom_call.1} parent=1 // pred_check_branch
      %12 = sbr.rel (0) target = $region5
    $region4: #{tpu_custom_call.1} parent=1 // pred_region
      _
    $region5: #{tpu_custom_call.1} parent=1 // pred_fallthru
      _
    // Predicated region
    $region6: #{tpu_custom_call.1} parent=1 // pred_check
      _
    $region7: #{tpu_custom_call.1} parent=1 // pred_check_branch
      %14 = sbr.rel (0) target = $region9
    $region8: #{tpu_custom_call.1} parent=1 // pred_region
      _
    $region9: #{tpu_custom_call.1} parent=1 // pred_fallthru
      _
    // Predicated region
    $region10: #{tpu_custom_call.1} parent=1 // pred_check
      _
    $region11: #{tpu_custom_call.1} parent=1 // pred_check_branch
      %16 = sbr.rel (0) target = $region13
    $region12: #{tpu_custom_call.1} parent=1 // pred_region
      _
    $region13: #{tpu_custom_call.1} parent=1 // pred_fallthru
      _
    // Predicated region
    $region14: #{tpu_custom_call.1} parent=1 // pred_check
      _
    $region15: #{tpu_custom_call.1} parent=1 // pred_check_branch
      %18 = sbr.rel (0) target = $region17
    $region16: #{tpu_custom_call.1} parent=1 // pred_region
      _
    $region17: #{tpu_custom_call.1} parent=1 // pred_fallthru
      _
    // Predicated region
    $region18: #{tpu_custom_call.1} parent=1 // pred_check
      _
    $region19: #{tpu_custom_call.1} parent=1 // pred_check_branch
      %20 = sbr.rel (0) target = $region21
    $region20: #{tpu_custom_call.1} parent=1 // pred_region
      _
    $region21: #{tpu_custom_call.1} parent=1 // pred_fallthru
      _
    %v21 = vld [vmem:[%s0] sm:$0xff]
    %v22 = vld [vmem:[%s0 + $0x8] sm:$0xff]
    %v23 = vld [vmem:[%s0 + $0x10] sm:$0xff]
    %v24 = vld [vmem:[%s0 + $0x18] sm:$0x3]
    %v25 = vld [vmem:[%s1] sm:$0xff]
    %v26 = vld [vmem:[%s1 + $0x8] sm:$0xff]
    %v27 = vld [vmem:[%s1 + $0x10] sm:$0xff]
    %v28 = vld [vmem:[%s1 + $0x18] sm:$0xff]
    %v29 = vld [vmem:[%s1 + $0x20] sm:$0xff]
    %v30 = vld [vmem:[%s1 + $0x28] sm:$0xff]
    %v31 = vld [vmem:[%s1 + $0x30] sm:$0xff]
    %v32 = vld [vmem:[%s1 + $0x38] sm:$0xff]
    %v33 = vld [vmem:[%s1 + $0x40] sm:$0xff]
    %v34 = vld [vmem:[%s1 + $0x48] sm:$0xff]
    %v35 = vld [vmem:[%s1 + $0x50] sm:$0xff]
    %v36 = vld [vmem:[%s1 + $0x58] sm:$0xff]
    %v37 = vld [vmem:[%s1 + $0x60] sm:$0xff]
    %v38 = vld [vmem:[%s1 + $0x68] sm:$0xff]
    %v39 = vld [vmem:[%s1 + $0x70] sm:$0xff]
    %v40 = vld [vmem:[%s1 + $0x78] sm:$0xff]
    %v41 = vld [vmem:[%s1 + $0x80] sm:$0xff]
    %v42 = vld [vmem:[%s1 + $0x88] sm:$0xff]
    %v43 = vld [vmem:[%s1 + $0x90] sm:$0xff]
    %v44 = vld [vmem:[%s1 + $0x98] sm:$0xff]
    %v45 = vld [vmem:[%s1 + $0xa0] sm:$0xff]
    %v46 = vld [vmem:[%s1 + $0xa8] sm:$0xff]
    %v47 = vld [vmem:[%s1 + $0xb0] sm:$0xff]
    %v48 = vld [vmem:[%s1 + $0xb8] sm:$0xff]
    %v49 = vld [vmem:[%s1 + $0xc0] sm:$0xff]
    %v50 = vld [vmem:[%s1 + $0xc8] sm:$0xff]
    %v51 = vld [vmem:[%s1 + $0xd0] sm:$0xff]
    %v52 = vld [vmem:[%s1 + $0xd8] sm:$0xff]
    %v53 = vld [vmem:[%s1 + $0xe0] sm:$0xff]
    %v54 = vld [vmem:[%s1 + $0xe8] sm:$0xff]
    %v55 = vld [vmem:[%s1 + $0xf0] sm:$0xff]
    %v56 = vld [vmem:[%s1 + $0xf8] sm:$0xff]
    %v57 = vld [vmem:[%s1 + $0x100] sm:$0xff]
    %v58 = vld [vmem:[%s1 + $0x108] sm:$0xff]
    %v59 = vld [vmem:[%s1 + $0x110] sm:$0xff]
    %v60 = vld [vmem:[%s1 + $0x118] sm:$0xff]
    %v61 = vld [vmem:[%s1 + $0x120] sm:$0xff]
    %v62 = vld [vmem:[%s1 + $0x128] sm:$0xff]
    %v63 = vld [vmem:[%s1 + $0x130] sm:$0xff]
    %v64 = vld [vmem:[%s1 + $0x138] sm:$0xff]
    %v65 = vld [vmem:[%s1 + $0x140] sm:$0xff]
    %v66 = vld [vmem:[%s1 + $0x148] sm:$0xff]
    %v67 = vld [vmem:[%s1 + $0x150] sm:$0xff]
    %v68 = vld [vmem:[%s1 + $0x158] sm:$0xff]
    %v69 = vld [vmem:[%s1 + $0x160] sm:$0xff]
    %v70 = vld [vmem:[%s1 + $0x168] sm:$0xff]
    %v71 = vld [vmem:[%s1 + $0x170] sm:$0xff]
    %v72 = vld [vmem:[%s1 + $0x178] sm:$0xff]
    %v73 = vld [vmem:[%s1 + $0x180] sm:$0xff]
    %v74 = vld [vmem:[%s1 + $0x188] sm:$0xff]
    %v75 = vld [vmem:[%s1 + $0x190] sm:$0xff]
    %v76 = vld [vmem:[%s1 + $0x198] sm:$0xff]
    %v77 = vld [vmem:[%s1 + $0x1a0] sm:$0xff]
    %v78 = vld [vmem:[%s1 + $0x1a8] sm:$0xff]
    %v79 = vld [vmem:[%s1 + $0x1b0] sm:$0xff]
    %v80 = vld [vmem:[%s1 + $0x1b8] sm:$0xff]
    %v81 = vld [vmem:[%s1 + $0x1c0] sm:$0xff]
    %v82 = vld [vmem:[%s1 + $0x1c8] sm:$0xff]
    %v83 = vld [vmem:[%s1 + $0x1d0] sm:$0xff]
    %v84 = vld [vmem:[%s1 + $0x1d8] sm:$0xff]
    %v85 = vld [vmem:[%s1 + $0x1e0] sm:$0xff]
    %v86 = vld [vmem:[%s1 + $0x1e8] sm:$0xff]
    %v87 = vld [vmem:[%s1 + $0x1f0] sm:$0xff]
    %v88 = vld [vmem:[%s1 + $0x1f8] sm:$0xff]
    %v89 = vld [vmem:[%s1 + $0x200] sm:$0xff]
    %v90 = vld [vmem:[%s1 + $0x208] sm:$0xff]
    %v91 = vld [vmem:[%s1 + $0x210] sm:$0xff]
    %v92 = vld [vmem:[%s1 + $0x218] sm:$0xff]
    %v93 = vld [vmem:[%s1 + $0x220] sm:$0xff]
    %v94 = vld [vmem:[%s1 + $0x228] sm:$0xff]
    %v95 = vld [vmem:[%s1 + $0x230] sm:$0xff]
    %v96 = vld [vmem:[%s1 + $0x238] sm:$0xff]
    %v97 = vld [vmem:[%s1 + $0x240] sm:$0xff]
    %v98 = vld [vmem:[%s1 + $0x248] sm:$0xff]
    %v99 = vld [vmem:[%s1 + $0x250] sm:$0xff]
    %v100 = vld [vmem:[%s1 + $0x258] sm:$0xff]
    %v101 = vld [vmem:[%s1 + $0x260] sm:$0xff]
    %v102 = vld [vmem:[%s1 + $0x268] sm:$0xff]
    %v103 = vld [vmem:[%s1 + $0x270] sm:$0xff]
    %v104 = vld [vmem:[%s1 + $0x278] sm:$0xff]
    %v105 = vld [vmem:[%s1 + $0x280] sm:$0xff]
    %v106 = vld [vmem:[%s1 + $0x288] sm:$0xff]
    %v107 = vld [vmem:[%s1 + $0x290] sm:$0xff]
    %v108 = vld [vmem:[%s1 + $0x298] sm:$0xff]
    %v109 = vld [vmem:[%s1 + $0x2a0] sm:$0xff]
    %v110 = vld [vmem:[%s1 + $0x2a8] sm:$0xff]
    %v111 = vld [vmem:[%s1 + $0x2b0] sm:$0xff]
    %v112 = vld [vmem:[%s1 + $0x2b8] sm:$0xff]
    %v113 = vld [vmem:[%s1 + $0x2c0] sm:$0xff]
    %v114 = vld [vmem:[%s1 + $0x2c8] sm:$0xff]
    %v115 = vld [vmem:[%s1 + $0x2d0] sm:$0xff]
    %v116 = vld [vmem:[%s1 + $0x2d8] sm:$0xff]
    %v117 = vld [vmem:[%s1 + $0x2e0] sm:$0xff]
    %v118 = vld [vmem:[%s1 + $0x2e8] sm:$0xff]
    %v119 = vld [vmem:[%s1 + $0x2f0] sm:$0xff]
    %v120 = vld [vmem:[%s1 + $0x2f8] sm:$0xff]
    %v121 = vld [vmem:[%s1 + $0x300] sm:$0xff]
    %v122 = vld [vmem:[%s1 + $0x308] sm:$0xff]
    %v123 = vld [vmem:[%s1 + $0x310] sm:$0xff]
    %v124 = vld [vmem:[%s1 + $0x318] sm:$0xff]
    %v125 = vld [vmem:[%s1 + $0x320] sm:$0xff]
    %v126 = vld [vmem:[%s1 + $0x328] sm:$0xff]
    %v127 = vld [vmem:[%s1 + $0x330] sm:$0xff]
    %v128 = vld [vmem:[%s1 + $0x338] sm:$0xff]
    %v129 = vld [vmem:[%s1 + $0x340] sm:$0xff]
    %v130 = vld [vmem:[%s1 + $0x348] sm:$0xff]
    %v131 = vld [vmem:[%s1 + $0x350] sm:$0xff]
    %v132 = vld [vmem:[%s1 + $0x358] sm:$0xff]
    %v133 = vld [vmem:[%s1 + $0x360] sm:$0xff]
    %v134 = vld [vmem:[%s1 + $0x368] sm:$0xff]
    %v135 = vld [vmem:[%s1 + $0x370] sm:$0xff]
    %v136 = vld [vmem:[%s1 + $0x378] sm:$0xff]
    %v137 = vld [vmem:[%s1 + $0x380] sm:$0xff]
    %v138 = vld [vmem:[%s1 + $0x388] sm:$0xff]
    %v139 = vld [vmem:[%s1 + $0x390] sm:$0xff]
    %v140 = vld [vmem:[%s1 + $0x398] sm:$0xff]
    %v141 = vld [vmem:[%s1 + $0x3a0] sm:$0xff]
    %v142 = vld [vmem:[%s1 + $0x3a8] sm:$0xff]
    %v143 = vld [vmem:[%s1 + $0x3b0] sm:$0xff]
    %v144 = vld [vmem:[%s1 + $0x3b8] sm:$0xff]
    %v145 = vld [vmem:[%s1 + $0x3c0] sm:$0xff]
    %v146 = vld [vmem:[%s1 + $0x3c8] sm:$0xff]
    %v147 = vld [vmem:[%s1 + $0x3d0] sm:$0xff]
    %v148 = vld [vmem:[%s1 + $0x3d8] sm:$0xff]
    %v149 = vld [vmem:[%s1 + $0x3e0] sm:$0xff]
    %v150 = vld [vmem:[%s1 + $0x3e8] sm:$0xff]
    %v151 = vld [vmem:[%s1 + $0x3f0] sm:$0xff]
    %v152 = vld [vmem:[%s1 + $0x3f8] sm:$0xff]
    %v153 = vld [vmem:[%s1 + $0x400] sm:$0xff]
    %v154 = vld [vmem:[%s1 + $0x408] sm:$0xff]
    %v155 = vld [vmem:[%s1 + $0x410] sm:$0xff]
    %v156 = vld [vmem:[%s1 + $0x418] sm:$0xff]
    %v157 = vld [vmem:[%s1 + $0x420] sm:$0xff]
    %v158 = vld [vmem:[%s1 + $0x428] sm:$0xff]
    %v159 = vld [vmem:[%s1 + $0x430] sm:$0xff]
    %v160 = vld [vmem:[%s1 + $0x438] sm:$0xff]
    %v161 = vld [vmem:[%s1 + $0x440] sm:$0xff]
    %v162 = vld [vmem:[%s1 + $0x448] sm:$0xff]
    %v163 = vld [vmem:[%s1 + $0x450] sm:$0xff]
    %v164 = vld [vmem:[%s1 + $0x458] sm:$0xff]
    %v165 = vld [vmem:[%s1 + $0x460] sm:$0xff]
    %v166 = vld [vmem:[%s1 + $0x468] sm:$0xff]
    %v167 = vld [vmem:[%s1 + $0x470] sm:$0xff]
    %v168 = vld [vmem:[%s1 + $0x478] sm:$0xff]
    %v169 = vld [vmem:[%s1 + $0x480] sm:$0xff]
    %v170 = vld [vmem:[%s1 + $0x488] sm:$0xff]
    %v171 = vld [vmem:[%s1 + $0x490] sm:$0xff]
    %v172 = vld [vmem:[%s1 + $0x498] sm:$0xff]
    %v173 = vld [vmem:[%s1 + $0x4a0] sm:$0xff]
    %v174 = vld [vmem:[%s1 + $0x4a8] sm:$0xff]
    %v175 = vld [vmem:[%s1 + $0x4b0] sm:$0xff]
    %v176 = vld [vmem:[%s1 + $0x4b8] sm:$0xff]
    %v177 = vld [vmem:[%s1 + $0x4c0] sm:$0xff]
    %v178 = vld [vmem:[%s1 + $0x4c8] sm:$0xff]
    %v179 = vld [vmem:[%s1 + $0x4d0] sm:$0xff]
    %v180 = vld [vmem:[%s1 + $0x4d8] sm:$0xff]
    %v181 = vld [vmem:[%s1 + $0x4e0] sm:$0xff]
    %v182 = vld [vmem:[%s1 + $0x4e8] sm:$0xff]
    %v183 = vld [vmem:[%s1 + $0x4f0] sm:$0xff]
    %v184 = vld [vmem:[%s1 + $0x4f8] sm:$0xff]
    %v185 = vld [vmem:[%s1 + $0x500] sm:$0xff]
    %v186 = vld [vmem:[%s1 + $0x508] sm:$0xff]
    %v187 = vld [vmem:[%s1 + $0x510] sm:$0xff]
    %v188 = vld [vmem:[%s1 + $0x518] sm:$0xff]
    %v189 = vld [vmem:[%s1 + $0x520] sm:$0xff]
    %v190 = vld [vmem:[%s1 + $0x528] sm:$0xff]
    %v191 = vld [vmem:[%s1 + $0x530] sm:$0xff]
    %v192 = vld [vmem:[%s1 + $0x538] sm:$0xff]
    %v193 = vld [vmem:[%s1 + $0x540] sm:$0xff]
    %v194 = vld [vmem:[%s1 + $0x548] sm:$0xff]
    %v195 = vld [vmem:[%s1 + $0x550] sm:$0xff]
    %v196 = vld [vmem:[%s1 + $0x558] sm:$0xff]
    %v197 = vld [vmem:[%s1 + $0x560] sm:$0xff]
    %v198 = vld [vmem:[%s1 + $0x568] sm:$0xff]
    %v199 = vld [vmem:[%s1 + $0x570] sm:$0xff]
    %v200 = vld [vmem:[%s1 + $0x578] sm:$0xff]
    %v201 = vld [vmem:[%s1 + $0x580] sm:$0xff]
    %v202 = vld [vmem:[%s1 + $0x588] sm:$0xff]
    %v203 = vld [vmem:[%s1 + $0x590] sm:$0xff]
    %v204 = vld [vmem:[%s1 + $0x598] sm:$0xff]
    %v205 = vld [vmem:[%s1 + $0x5a0] sm:$0xff]
    %v206 = vld [vmem:[%s1 + $0x5a8] sm:$0xff]
    %v207 = vld [vmem:[%s1 + $0x5b0] sm:$0xff]
    %v208 = vld [vmem:[%s1 + $0x5b8] sm:$0xff]
    %v209 = vld [vmem:[%s1 + $0x5c0] sm:$0xff]
    %v210 = vld [vmem:[%s1 + $0x5c8] sm:$0xff]
    %v211 = vld [vmem:[%s1 + $0x5d0] sm:$0xff]
    %v212 = vld [vmem:[%s1 + $0x5d8] sm:$0xff]
    %v213 = vld [vmem:[%s1 + $0x5e0] sm:$0xff]
    %v214 = vld [vmem:[%s1 + $0x5e8] sm:$0xff]
    %v215 = vld [vmem:[%s1 + $0x5f0] sm:$0xff]
    %v216 = vld [vmem:[%s1 + $0x5f8] sm:$0xff]
    %v217 = vld [vmem:[%s1 + $0x600] sm:$0xff]
    %v218 = vld [vmem:[%s1 + $0x608] sm:$0xff]
    %v219 = vld [vmem:[%s1 + $0x610] sm:$0xff]
    %v220 = vld [vmem:[%s1 + $0x618] sm:$0xff]
    %v221 = vld [vmem:[%s1 + $0x620] sm:$0xff]
    %v222 = vld [vmem:[%s1 + $0x628] sm:$0xff]
    %v223 = vld [vmem:[%s1 + $0x630] sm:$0xff]
    %v224 = vld [vmem:[%s1 + $0x638] sm:$0xff]
    %v225 = vld [vmem:[%s2] sm:$0x1]
    %v227 = vlaneseq
    %v228 = vshrl.u32 %v227, 7
    %v229 = vsub.s32 0, %v228
    %v230 = vrot.slane %v225, %v229
    %v236 = vcombine.high %v21, %v21
    %v238 = vunpack.c.l.s4 1983009808
    %v239 = vunpack.c.0.s8 %v238
    %v240 = vlaneseq
    %v241 = vshrl.u32 %v240, 7
    %v242 = vsub.s32 %v239, %v241
    %v243 = vrot.slane %v21, %v242
    %v245 = vunpack.c.l.s4 1983009808
    %v246 = vunpack.c.0.s8 %v245
    %v247 = vlaneseq
    %v248 = vshrl.u32 %v247, 7
    %v249 = vsub.s32 %v246, %v248
    %v250 = vrot.slane %v236, %v249
    %v251 = vcombine.high %v243, %v243
    %v252 = vcombine.high %v250, %v250
    %v253 = vcombine.high %v22, %v22
    %v255 = vunpack.c.l.s4 1983009808
    %v256 = vunpack.c.0.s8 %v255
    %v257 = vlaneseq
    %v258 = vshrl.u32 %v257, 7
    %v259 = vsub.s32 %v256, %v258
    %v260 = vrot.slane %v22, %v259
    %v262 = vunpack.c.l.s4 1983009808
    %v263 = vunpack.c.0.s8 %v262
    %v264 = vlaneseq
    %v265 = vshrl.u32 %v264, 7
    %v266 = vsub.s32 %v263, %v265
    %v267 = vrot.slane %v253, %v266
    %v268 = vcombine.high %v260, %v260
    %v269 = vcombine.high %v267, %v267
    %v270 = vcombine.high %v23, %v23
    %v272 = vunpack.c.l.s4 1983009808
    %v273 = vunpack.c.0.s8 %v272
    %v274 = vlaneseq
    %v275 = vshrl.u32 %v274, 7
    %v276 = vsub.s32 %v273, %v275
    %v277 = vrot.slane %v23, %v276
    %v279 = vunpack.c.l.s4 1983009808
    %v280 = vunpack.c.0.s8 %v279
    %v281 = vlaneseq
    %v282 = vshrl.u32 %v281, 7
    %v283 = vsub.s32 %v280, %v282
    %v284 = vrot.slane %v270, %v283
    %v285 = vcombine.high %v277, %v277
    %v286 = vcombine.high %v284, %v284
    %v288 = vunpack.c.l.s4 1983009808
    %v289 = vunpack.c.0.s8 %v288
    %v290 = vlaneseq
    %v291 = vshrl.u32 %v290, 7
    %v292 = vsub.s32 %v289, %v291
    %v293 = vrot.slane %v24, %v292
    %vm306 = vcmask 523264
    %v307 = vsel %vm306, %v293, 0
    %309 = vmatprep.subr.mxu0 0.0
    %310 = vmatpush1.msra.mxu0 %v40
    %311 = vmatprep.subr.mxu0 0.0
    %312 = vmatpush1.msra.mxu0 %v39
    %313 = vmatprep.subr.mxu0 0.0
    %314 = vmatpush1.msra.mxu0 %v38
    %315 = vmatprep.subr.mxu0 0.0
    %316 = vmatpush1.msra.mxu0 %v37
    %317 = vmatprep.subr.mxu0 0.0
    %318 = vmatpush1.msra.mxu0 %v36
    %319 = vmatprep.subr.mxu0 0.0
    %320 = vmatpush1.msra.mxu0 %v35
    %321 = vmatprep.subr.mxu0 0.0
    %322 = vmatpush1.msra.mxu0 %v34
    %323 = vmatprep.subr.mxu0 0.0
    %324 = vmatpush1.msra.mxu0 %v33
    %325 = vmatprep.subr.mxu0 0.0
    %326 = vmatpush1.msra.mxu0 %v32
    %327 = vmatprep.subr.mxu0 0.0
    %328 = vmatpush1.msra.mxu0 %v31
    %329 = vmatprep.subr.mxu0 0.0
    %330 = vmatpush1.msra.mxu0 %v30
    %331 = vmatprep.subr.mxu0 0.0
    %332 = vmatpush1.msra.mxu0 %v29
    %333 = vmatprep.subr.mxu0 0.0
    %334 = vmatpush1.msra.mxu0 %v28
    %335 = vmatprep.subr.mxu0 0.0
    %336 = vmatpush1.msra.mxu0 %v27
    %337 = vmatprep.subr.mxu0 0.0
    %338 = vmatpush1.msra.mxu0 %v26
    %339 = vmatprep.subr.mxu0 0.0
    %340 = vmatpush1.msra.mxu0 %v25
    %341 = vmatprep.subr.mxu0 0.0
    %342 = vmatpush2.msra.mxu0 %v56
    %343 = vmatprep.subr.mxu0 0.0
    %344 = vmatpush2.msra.mxu0 %v55
    %345 = vmatprep.subr.mxu0 0.0
    %346 = vmatpush2.msra.mxu0 %v54
    %347 = vmatprep.subr.mxu0 0.0
    %348 = vmatpush2.msra.mxu0 %v53
    %349 = vmatprep.subr.mxu0 0.0
    %350 = vmatpush2.msra.mxu0 %v52
    %351 = vmatprep.subr.mxu0 0.0
    %352 = vmatpush2.msra.mxu0 %v51
    %353 = vmatprep.subr.mxu0 0.0
    %354 = vmatpush2.msra.mxu0 %v50
    %355 = vmatprep.subr.mxu0 0.0
    %356 = vmatpush2.msra.mxu0 %v49
    %357 = vmatprep.subr.mxu0 0.0
    %358 = vmatpush2.msra.mxu0 %v48
    %359 = vmatprep.subr.mxu0 0.0
    %360 = vmatpush2.msra.mxu0 %v47
    %361 = vmatprep.subr.mxu0 0.0
    %362 = vmatpush2.msra.mxu0 %v46
    %363 = vmatprep.subr.mxu0 0.0
    %364 = vmatpush2.msra.mxu0 %v45
    %365 = vmatprep.subr.mxu0 0.0
    %366 = vmatpush2.msra.mxu0 %v44
    %367 = vmatprep.subr.mxu0 0.0
    %368 = vmatpush2.msra.mxu0 %v43
    %369 = vmatprep.subr.mxu0 0.0
    %370 = vmatpush2.msra.mxu0 %v42
    %371 = vmatprep.subr.mxu0 0.0
    %372 = vmatpush2.msra.mxu0 %v41
    %373 = vmatprep.mubr.f32.mxu0 %v251
    %374 = vmatmul.mubr.f32.gmra.mxu0 %v243
    %v375 = vpop.f32.mrf.mxu0
    %v376 = vadd.f32 %v230, %v375
    %v377 = vpop.f32.mrf.mxu0
    %378 = vdwg.mxu0
    %379 = vmatprep.subr.mxu0 0.0
    %380 = vmatpush1.msra.mxu0 %v72
    %381 = vmatprep.subr.mxu0 0.0
    %382 = vmatpush1.msra.mxu0 %v71
    %383 = vmatprep.subr.mxu0 0.0
    %384 = vmatpush1.msra.mxu0 %v70
    %385 = vmatprep.subr.mxu0 0.0
    %386 = vmatpush1.msra.mxu0 %v69
    %387 = vmatprep.subr.mxu0 0.0
    %388 = vmatpush1.msra.mxu0 %v68
    %389 = vmatprep.subr.mxu0 0.0
    %390 = vmatpush1.msra.mxu0 %v67
    %391 = vmatprep.subr.mxu0 0.0
    %392 = vmatpush1.msra.mxu0 %v66
    %393 = vmatprep.subr.mxu0 0.0
    %394 = vmatpush1.msra.mxu0 %v65
    %395 = vmatprep.subr.mxu0 0.0
    %396 = vmatpush1.msra.mxu0 %v64
    %397 = vmatprep.subr.mxu0 0.0
    %398 = vmatpush1.msra.mxu0 %v63
    %399 = vmatprep.subr.mxu0 0.0
    %400 = vmatpush1.msra.mxu0 %v62
    %401 = vmatprep.subr.mxu0 0.0
    %402 = vmatpush1.msra.mxu0 %v61
    %403 = vmatprep.subr.mxu0 0.0
    %404 = vmatpush1.msra.mxu0 %v60
    %405 = vmatprep.subr.mxu0 0.0
    %406 = vmatpush1.msra.mxu0 %v59
    %407 = vmatprep.subr.mxu0 0.0
    %408 = vmatpush1.msra.mxu0 %v58
    %409 = vmatprep.subr.mxu0 0.0
    %410 = vmatpush1.msra.mxu0 %v57
    %411 = vmatprep.subr.mxu0 0.0
    %412 = vmatpush2.msra.mxu0 %v88
    %413 = vmatprep.subr.mxu0 0.0
    %414 = vmatpush2.msra.mxu0 %v87
    %415 = vmatprep.subr.mxu0 0.0
    %416 = vmatpush2.msra.mxu0 %v86
    %417 = vmatprep.subr.mxu0 0.0
    %418 = vmatpush2.msra.mxu0 %v85
    %419 = vmatprep.subr.mxu0 0.0
    %420 = vmatpush2.msra.mxu0 %v84
    %421 = vmatprep.subr.mxu0 0.0
    %422 = vmatpush2.msra.mxu0 %v83
    %423 = vmatprep.subr.mxu0 0.0
    %424 = vmatpush2.msra.mxu0 %v82
    %425 = vmatprep.subr.mxu0 0.0
    %426 = vmatpush2.msra.mxu0 %v81
    %427 = vmatprep.subr.mxu0 0.0
    %428 = vmatpush2.msra.mxu0 %v80
    %429 = vmatprep.subr.mxu0 0.0
    %430 = vmatpush2.msra.mxu0 %v79
    %431 = vmatprep.subr.mxu0 0.0
    %432 = vmatpush2.msra.mxu0 %v78
    %433 = vmatprep.subr.mxu0 0.0
    %434 = vmatpush2.msra.mxu0 %v77
    %435 = vmatprep.subr.mxu0 0.0
    %436 = vmatpush2.msra.mxu0 %v76
    %437 = vmatprep.subr.mxu0 0.0
    %438 = vmatpush2.msra.mxu0 %v75
    %439 = vmatprep.subr.mxu0 0.0
    %440 = vmatpush2.msra.mxu0 %v74
    %441 = vmatprep.subr.mxu0 0.0
    %442 = vmatpush2.msra.mxu0 %v73
    %443 = vmatprep.mubr.f32.mxu0 %v252
    %444 = vmatmul.mubr.f32.gmra.mxu0 %v250
    %v445 = vpop.f32.mrf.mxu0
    %v446 = vadd.f32 %v376, %v445
    %v447 = vpop.f32.mrf.mxu0
    %448 = vdwg.mxu0
    %449 = vmatprep.subr.mxu0 0.0
    %450 = vmatpush1.msra.mxu0 %v104
    %451 = vmatprep.subr.mxu0 0.0
    %452 = vmatpush1.msra.mxu0 %v103
    %453 = vmatprep.subr.mxu0 0.0
    %454 = vmatpush1.msra.mxu0 %v102
    %455 = vmatprep.subr.mxu0 0.0
    %456 = vmatpush1.msra.mxu0 %v101
    %457 = vmatprep.subr.mxu0 0.0
    %458 = vmatpush1.msra.mxu0 %v100
    %459 = vmatprep.subr.mxu0 0.0
    %460 = vmatpush1.msra.mxu0 %v99
    %461 = vmatprep.subr.mxu0 0.0
    %462 = vmatpush1.msra.mxu0 %v98
    %463 = vmatprep.subr.mxu0 0.0
    %464 = vmatpush1.msra.mxu0 %v97
    %465 = vmatprep.subr.mxu0 0.0
    %466 = vmatpush1.msra.mxu0 %v96
    %467 = vmatprep.subr.mxu0 0.0
    %468 = vmatpush1.msra.mxu0 %v95
    %469 = vmatprep.subr.mxu0 0.0
    %470 = vmatpush1.msra.mxu0 %v94
    %471 = vmatprep.subr.mxu0 0.0
    %472 = vmatpush1.msra.mxu0 %v93
    %473 = vmatprep.subr.mxu0 0.0
    %474 = vmatpush1.msra.mxu0 %v92
    %475 = vmatprep.subr.mxu0 0.0
    %476 = vmatpush1.msra.mxu0 %v91
    %477 = vmatprep.subr.mxu0 0.0
    %478 = vmatpush1.msra.mxu0 %v90
    %479 = vmatprep.subr.mxu0 0.0
    %480 = vmatpush1.msra.mxu0 %v89
    %481 = vmatprep.subr.mxu0 0.0
    %482 = vmatpush2.msra.mxu0 %v120
    %483 = vmatprep.subr.mxu0 0.0
    %484 = vmatpush2.msra.mxu0 %v119
    %485 = vmatprep.subr.mxu0 0.0
    %486 = vmatpush2.msra.mxu0 %v118
    %487 = vmatprep.subr.mxu0 0.0
    %488 = vmatpush2.msra.mxu0 %v117
    %489 = vmatprep.subr.mxu0 0.0
    %490 = vmatpush2.msra.mxu0 %v116
    %491 = vmatprep.subr.mxu0 0.0
    %492 = vmatpush2.msra.mxu0 %v115
    %493 = vmatprep.subr.mxu0 0.0
    %494 = vmatpush2.msra.mxu0 %v114
    %495 = vmatprep.subr.mxu0 0.0
    %496 = vmatpush2.msra.mxu0 %v113
    %497 = vmatprep.subr.mxu0 0.0
    %498 = vmatpush2.msra.mxu0 %v112
    %499 = vmatprep.subr.mxu0 0.0
    %500 = vmatpush2.msra.mxu0 %v111
    %501 = vmatprep.subr.mxu0 0.0
    %502 = vmatpush2.msra.mxu0 %v110
    %503 = vmatprep.subr.mxu0 0.0
    %504 = vmatpush2.msra.mxu0 %v109
    %505 = vmatprep.subr.mxu0 0.0
    %506 = vmatpush2.msra.mxu0 %v108
    %507 = vmatprep.subr.mxu0 0.0
    %508 = vmatpush2.msra.mxu0 %v107
    %509 = vmatprep.subr.mxu0 0.0
    %510 = vmatpush2.msra.mxu0 %v106
    %511 = vmatprep.subr.mxu0 0.0
    %512 = vmatpush2.msra.mxu0 %v105
    %513 = vmatprep.mubr.f32.mxu0 %v268
    %514 = vmatmul.mubr.f32.gmra.mxu0 %v260
    %v515 = vpop.f32.mrf.mxu0
    %v516 = vadd.f32 %v446, %v515
    %v517 = vpop.f32.mrf.mxu0
    %518 = vdwg.mxu0
    %519 = vmatprep.subr.mxu0 0.0
    %520 = vmatpush1.msra.mxu0 %v136
    %521 = vmatprep.subr.mxu0 0.0
    %522 = vmatpush1.msra.mxu0 %v135
    %523 = vmatprep.subr.mxu0 0.0
    %524 = vmatpush1.msra.mxu0 %v134
    %525 = vmatprep.subr.mxu0 0.0
    %526 = vmatpush1.msra.mxu0 %v133
    %527 = vmatprep.subr.mxu0 0.0
    %528 = vmatpush1.msra.mxu0 %v132
    %529 = vmatprep.subr.mxu0 0.0
    %530 = vmatpush1.msra.mxu0 %v131
    %531 = vmatprep.subr.mxu0 0.0
    %532 = vmatpush1.msra.mxu0 %v130
    %533 = vmatprep.subr.mxu0 0.0
    %534 = vmatpush1.msra.mxu0 %v129
    %535 = vmatprep.subr.mxu0 0.0
    %536 = vmatpush1.msra.mxu0 %v128
    %537 = vmatprep.subr.mxu0 0.0
    %538 = vmatpush1.msra.mxu0 %v127
    %539 = vmatprep.subr.mxu0 0.0
    %540 = vmatpush1.msra.mxu0 %v126
    %541 = vmatprep.subr.mxu0 0.0
    %542 = vmatpush1.msra.mxu0 %v125
    %543 = vmatprep.subr.mxu0 0.0
    %544 = vmatpush1.msra.mxu0 %v124
    %545 = vmatprep.subr.mxu0 0.0
    %546 = vmatpush1.msra.mxu0 %v123
    %547 = vmatprep.subr.mxu0 0.0
    %548 = vmatpush1.msra.mxu0 %v122
    %549 = vmatprep.subr.mxu0 0.0
    %550 = vmatpush1.msra.mxu0 %v121
    %551 = vmatprep.subr.mxu0 0.0
    %552 = vmatpush2.msra.mxu0 %v152
    %553 = vmatprep.subr.mxu0 0.0
    %554 = vmatpush2.msra.mxu0 %v151
    %555 = vmatprep.subr.mxu0 0.0
    %556 = vmatpush2.msra.mxu0 %v150
    %557 = vmatprep.subr.mxu0 0.0
    %558 = vmatpush2.msra.mxu0 %v149
    %559 = vmatprep.subr.mxu0 0.0
    %560 = vmatpush2.msra.mxu0 %v148
    %561 = vmatprep.subr.mxu0 0.0
    %562 = vmatpush2.msra.mxu0 %v147
    %563 = vmatprep.subr.mxu0 0.0
    %564 = vmatpush2.msra.mxu0 %v146
    %565 = vmatprep.subr.mxu0 0.0
    %566 = vmatpush2.msra.mxu0 %v145
    %567 = vmatprep.subr.mxu0 0.0
    %568 = vmatpush2.msra.mxu0 %v144
    %569 = vmatprep.subr.mxu0 0.0
    %570 = vmatpush2.msra.mxu0 %v143
    %571 = vmatprep.subr.mxu0 0.0
    %572 = vmatpush2.msra.mxu0 %v142
    %573 = vmatprep.subr.mxu0 0.0
    %574 = vmatpush2.msra.mxu0 %v141
    %575 = vmatprep.subr.mxu0 0.0
    %576 = vmatpush2.msra.mxu0 %v140
    %577 = vmatprep.subr.mxu0 0.0
    %578 = vmatpush2.msra.mxu0 %v139
    %579 = vmatprep.subr.mxu0 0.0
    %580 = vmatpush2.msra.mxu0 %v138
    %581 = vmatprep.subr.mxu0 0.0
    %582 = vmatpush2.msra.mxu0 %v137
    %583 = vmatprep.mubr.f32.mxu0 %v269
    %584 = vmatmul.mubr.f32.gmra.mxu0 %v267
    %v585 = vpop.f32.mrf.mxu0
    %v586 = vadd.f32 %v516, %v585
    %v587 = vpop.f32.mrf.mxu0
    %588 = vdwg.mxu0
    %589 = vmatprep.subr.mxu0 0.0
    %590 = vmatpush1.msra.mxu0 %v168
    %591 = vmatprep.subr.mxu0 0.0
    %592 = vmatpush1.msra.mxu0 %v167
    %593 = vmatprep.subr.mxu0 0.0
    %594 = vmatpush1.msra.mxu0 %v166
    %595 = vmatprep.subr.mxu0 0.0
    %596 = vmatpush1.msra.mxu0 %v165
    %597 = vmatprep.subr.mxu0 0.0
    %598 = vmatpush1.msra.mxu0 %v164
    %599 = vmatprep.subr.mxu0 0.0
    %600 = vmatpush1.msra.mxu0 %v163
    %601 = vmatprep.subr.mxu0 0.0
    %602 = vmatpush1.msra.mxu0 %v162
    %603 = vmatprep.subr.mxu0 0.0
    %604 = vmatpush1.msra.mxu0 %v161
    %605 = vmatprep.subr.mxu0 0.0
    %606 = vmatpush1.msra.mxu0 %v160
    %607 = vmatprep.subr.mxu0 0.0
    %608 = vmatpush1.msra.mxu0 %v159
    %609 = vmatprep.subr.mxu0 0.0
    %610 = vmatpush1.msra.mxu0 %v158
    %611 = vmatprep.subr.mxu0 0.0
    %612 = vmatpush1.msra.mxu0 %v157
    %613 = vmatprep.subr.mxu0 0.0
    %614 = vmatpush1.msra.mxu0 %v156
    %615 = vmatprep.subr.mxu0 0.0
    %616 = vmatpush1.msra.mxu0 %v155
    %617 = vmatprep.subr.mxu0 0.0
    %618 = vmatpush1.msra.mxu0 %v154
    %619 = vmatprep.subr.mxu0 0.0
    %620 = vmatpush1.msra.mxu0 %v153
    %621 = vmatprep.subr.mxu0 0.0
    %622 = vmatpush2.msra.mxu0 %v184
    %623 = vmatprep.subr.mxu0 0.0
    %624 = vmatpush2.msra.mxu0 %v183
    %625 = vmatprep.subr.mxu0 0.0
    %626 = vmatpush2.msra.mxu0 %v182
    %627 = vmatprep.subr.mxu0 0.0
    %628 = vmatpush2.msra.mxu0 %v181
    %629 = vmatprep.subr.mxu0 0.0
    %630 = vmatpush2.msra.mxu0 %v180
    %631 = vmatprep.subr.mxu0 0.0
    %632 = vmatpush2.msra.mxu0 %v179
    %633 = vmatprep.subr.mxu0 0.0
    %634 = vmatpush2.msra.mxu0 %v178
    %635 = vmatprep.subr.mxu0 0.0
    %636 = vmatpush2.msra.mxu0 %v177
    %637 = vmatprep.subr.mxu0 0.0
    %638 = vmatpush2.msra.mxu0 %v176
    %639 = vmatprep.subr.mxu0 0.0
    %640 = vmatpush2.msra.mxu0 %v175
    %641 = vmatprep.subr.mxu0 0.0
    %642 = vmatpush2.msra.mxu0 %v174
    %643 = vmatprep.subr.mxu0 0.0
    %644 = vmatpush2.msra.mxu0 %v173
    %645 = vmatprep.subr.mxu0 0.0
    %646 = vmatpush2.msra.mxu0 %v172
    %647 = vmatprep.subr.mxu0 0.0
    %648 = vmatpush2.msra.mxu0 %v171
    %649 = vmatprep.subr.mxu0 0.0
    %650 = vmatpush2.msra.mxu0 %v170
    %651 = vmatprep.subr.mxu0 0.0
    %652 = vmatpush2.msra.mxu0 %v169
    %653 = vmatprep.mubr.f32.mxu0 %v285
    %654 = vmatmul.mubr.f32.gmra.mxu0 %v277
    %v655 = vpop.f32.mrf.mxu0
    %v656 = vadd.f32 %v586, %v655
    %v657 = vpop.f32.mrf.mxu0
    %658 = vdwg.mxu0
    %659 = vmatprep.subr.mxu0 0.0
    %660 = vmatpush1.msra.mxu0 %v200
    %661 = vmatprep.subr.mxu0 0.0
    %662 = vmatpush1.msra.mxu0 %v199
    %663 = vmatprep.subr.mxu0 0.0
    %664 = vmatpush1.msra.mxu0 %v198
    %665 = vmatprep.subr.mxu0 0.0
    %666 = vmatpush1.msra.mxu0 %v197
    %667 = vmatprep.subr.mxu0 0.0
    %668 = vmatpush1.msra.mxu0 %v196
    %669 = vmatprep.subr.mxu0 0.0
    %670 = vmatpush1.msra.mxu0 %v195
    %671 = vmatprep.subr.mxu0 0.0
    %672 = vmatpush1.msra.mxu0 %v194
    %673 = vmatprep.subr.mxu0 0.0
    %674 = vmatpush1.msra.mxu0 %v193
    %675 = vmatprep.subr.mxu0 0.0
    %676 = vmatpush1.msra.mxu0 %v192
    %677 = vmatprep.subr.mxu0 0.0
    %678 = vmatpush1.msra.mxu0 %v191
    %679 = vmatprep.subr.mxu0 0.0
    %680 = vmatpush1.msra.mxu0 %v190
    %681 = vmatprep.subr.mxu0 0.0
    %682 = vmatpush1.msra.mxu0 %v189
    %683 = vmatprep.subr.mxu0 0.0
    %684 = vmatpush1.msra.mxu0 %v188
    %685 = vmatprep.subr.mxu0 0.0
    %686 = vmatpush1.msra.mxu0 %v187
    %687 = vmatprep.subr.mxu0 0.0
    %688 = vmatpush1.msra.mxu0 %v186
    %689 = vmatprep.subr.mxu0 0.0
    %690 = vmatpush1.msra.mxu0 %v185
    %691 = vmatprep.subr.mxu0 0.0
    %692 = vmatpush2.msra.mxu0 %v216
    %693 = vmatprep.subr.mxu0 0.0
    %694 = vmatpush2.msra.mxu0 %v215
    %695 = vmatprep.subr.mxu0 0.0
    %696 = vmatpush2.msra.mxu0 %v214
    %697 = vmatprep.subr.mxu0 0.0
    %698 = vmatpush2.msra.mxu0 %v213
    %699 = vmatprep.subr.mxu0 0.0
    %700 = vmatpush2.msra.mxu0 %v212
    %701 = vmatprep.subr.mxu0 0.0
    %702 = vmatpush2.msra.mxu0 %v211
    %703 = vmatprep.subr.mxu0 0.0
    %704 = vmatpush2.msra.mxu0 %v210
    %705 = vmatprep.subr.mxu0 0.0
    %706 = vmatpush2.msra.mxu0 %v209
    %707 = vmatprep.subr.mxu0 0.0
    %708 = vmatpush2.msra.mxu0 %v208
    %709 = vmatprep.subr.mxu0 0.0
    %710 = vmatpush2.msra.mxu0 %v207
    %711 = vmatprep.subr.mxu0 0.0
    %712 = vmatpush2.msra.mxu0 %v206
    %713 = vmatprep.subr.mxu0 0.0
    %714 = vmatpush2.msra.mxu0 %v205
    %715 = vmatprep.subr.mxu0 0.0
    %716 = vmatpush2.msra.mxu0 %v204
    %717 = vmatprep.subr.mxu0 0.0
    %718 = vmatpush2.msra.mxu0 %v203
    %719 = vmatprep.subr.mxu0 0.0
    %720 = vmatpush2.msra.mxu0 %v202
    %721 = vmatprep.subr.mxu0 0.0
    %722 = vmatpush2.msra.mxu0 %v201
    %723 = vmatprep.mubr.f32.mxu0 %v286
    %724 = vmatmul.mubr.f32.gmra.mxu0 %v284
    %v725 = vpop.f32.mrf.mxu0
    %v726 = vadd.f32 %v656, %v725
    %v727 = vpop.f32.mrf.mxu0
    %728 = vdwg.mxu0
    %729 = vmatprep.subr.mxu0 0.0
    %730 = vmatpush1.msra.mxu0 0.0
    %731 = vmatprep.subr.mxu0 0.0
    %732 = vmatpush1.msra.mxu0 0.0
    %733 = vmatprep.subr.mxu0 0.0
    %734 = vmatpush1.msra.mxu0 0.0
    %735 = vmatprep.subr.mxu0 0.0
    %736 = vmatpush1.msra.mxu0 0.0
    %737 = vmatprep.subr.mxu0 0.0
    %738 = vmatpush1.msra.mxu0 0.0
    %739 = vmatprep.subr.mxu0 0.0
    %740 = vmatpush1.msra.mxu0 0.0
    %741 = vmatprep.subr.mxu0 0.0
    %742 = vmatpush1.msra.mxu0 0.0
    %743 = vmatprep.subr.mxu0 0.0
    %744 = vmatpush1.msra.mxu0 0.0
    %745 = vmatprep.subr.mxu0 0.0
    %746 = vmatpush1.msra.mxu0 %v224
    %747 = vmatprep.subr.mxu0 0.0
    %748 = vmatpush1.msra.mxu0 %v223
    %749 = vmatprep.subr.mxu0 0.0
    %750 = vmatpush1.msra.mxu0 %v222
    %751 = vmatprep.subr.mxu0 0.0
    %752 = vmatpush1.msra.mxu0 %v221
    %753 = vmatprep.subr.mxu0 0.0
    %754 = vmatpush1.msra.mxu0 %v220
    %755 = vmatprep.subr.mxu0 0.0
    %756 = vmatpush1.msra.mxu0 %v219
    %757 = vmatprep.subr.mxu0 0.0
    %758 = vmatpush1.msra.mxu0 %v218
    %759 = vmatprep.subr.mxu0 0.0
    %760 = vmatpush1.msra.mxu0 %v217
    %761 = vmatprep.subr.mxu0 0.0
    %762 = vmatpush2.msra.mxu0 0.0
    %763 = vmatprep.subr.mxu0 0.0
    %764 = vmatpush2.msra.mxu0 0.0
    %765 = vmatprep.subr.mxu0 0.0
    %766 = vmatpush2.msra.mxu0 0.0
    %767 = vmatprep.subr.mxu0 0.0
    %768 = vmatpush2.msra.mxu0 0.0
    %769 = vmatprep.subr.mxu0 0.0
    %770 = vmatpush2.msra.mxu0 0.0
    %771 = vmatprep.subr.mxu0 0.0
    %772 = vmatpush2.msra.mxu0 0.0
    %773 = vmatprep.subr.mxu0 0.0
    %774 = vmatpush2.msra.mxu0 0.0
    %775 = vmatprep.subr.mxu0 0.0
    %776 = vmatpush2.msra.mxu0 0.0
    %777 = vmatprep.subr.mxu0 0.0
    %778 = vmatpush2.msra.mxu0 0.0
    %779 = vmatprep.subr.mxu0 0.0
    %780 = vmatpush2.msra.mxu0 0.0
    %781 = vmatprep.subr.mxu0 0.0
    %782 = vmatpush2.msra.mxu0 0.0
    %783 = vmatprep.subr.mxu0 0.0
    %784 = vmatpush2.msra.mxu0 0.0
    %785 = vmatprep.subr.mxu0 0.0
    %786 = vmatpush2.msra.mxu0 0.0
    %787 = vmatprep.subr.mxu0 0.0
    %788 = vmatpush2.msra.mxu0 0.0
    %789 = vmatprep.subr.mxu0 0.0
    %790 = vmatpush2.msra.mxu0 0.0
    %791 = vmatprep.subr.mxu0 0.0
    %792 = vmatpush2.msra.mxu0 0.0
    %793 = vmatprep.mubr.f32.mxu0 0.0
    %794 = vmatmul.mubr.f32.gmra.mxu0 %v307
    %v795 = vpop.f32.mrf.mxu0
    %v796 = vadd.f32 %v726, %v795
    %v797 = vpop.f32.mrf.mxu0
    %798 = vdwg.mxu0
    %v799 = vmax.f32 %v796, 0.0
    %vm800 = vcmask 107520
    %v801 = vsel %vm800, %v799, -inf
    %802 = vmax.xlane.f32.xlu0 %v801
    %v803 = vpop.xlane.xlu0 %802
    %vm804 = vcmask 214128
    %v805 = vsel %vm804, %v799, -inf
    %806 = vmax.xlane.f32.xlu0 %v805
    %v807 = vpop.xlane.xlu0 %806
    %vm808 = vcmask 312536
    %v809 = vsel %vm808, %v799, -inf
    %810 = vmax.xlane.f32.xlu0 %v809
    %v811 = vpop.xlane.xlu0 %810
    %v812 = vld [vmem:[%s3] sm:$0x7]
    %v813 = vlaneseq
    %v814 = vshrl.u32 %v813, 7
    %v815 = vsub.s32 0, %v814
    %v816 = vrot.slane %v812, %v815
    %v817 = vmul.f32 %v803, %v816
    %v818 = vlaneseq
    %v819 = vshrl.u32 %v818, 7
    %v820 = vsub.s32 1, %v819
    %v821 = vrot.slane %v812, %v820
    %v822 = vmul.f32 %v807, %v821
    %v823 = vadd.f32 %v817, %v822
    %v824 = vlaneseq
    %v825 = vshrl.u32 %v824, 7
    %v826 = vsub.s32 2, %v825
    %v827 = vrot.slane %v812, %v826
    %v828 = vmul.f32 %v811, %v827
    %v829 = vadd.f32 %v823, %v828
    %v830 = vld [vmem:[%s4] sm:$0x1]
    %v832 = vlaneseq
    %v833 = vshrl.u32 %v832, 7
    %v834 = vsub.s32 0, %v833
    %v835 = vrot.slane %v830, %v834
    %v837 = vadd.f32 %v829, %v835
    %838 = vst [vmem:[#allocation2] sm:$0x3] %v837
    // Predicated region
    $region22: #{tpu_custom_call.1} parent=1 // pred_check
      _
    $region23: #{tpu_custom_call.1} parent=1 // pred_check_branch
      %840 = sbr.rel (0) target = $region25
    $region24: #{tpu_custom_call.1} parent=1 // pred_region
      %s842 = ssub.s32 32, 32
      %843 = vsyncadd [#allocation3], %s842
      %s845 = sshll.u32 [#allocation2], 4
      %s846 = int_to_ptr.vmem [resolvable:$true] %s845
      %848 = dma.vmem_to_hbm [thread:$0]  %s846, 32, %s5, [#allocation3]
    $region25: #{tpu_custom_call.1} parent=1 // pred_fallthru
      _
    // Predicated region
    $region26: #{tpu_custom_call.1} parent=1 // pred_check
      _
    $region27: #{tpu_custom_call.1} parent=1 // pred_check_branch
      %850 = sbr.rel (0) target = $region29
    $region28: #{tpu_custom_call.1} parent=1 // pred_region
      %851 = dma.done [#allocation3], 32
    $region29: #{tpu_custom_call.1} parent=1 // pred_fallthru
      _
    %852 = vsyncpa [#allocation3], 1

</llo_original>
